<compile_context>
chip_gen: v7x
topology: tpu7x:2x2x1
jax: 0.10.0
libtpu: 0.0.40
codegen_flags: <defaults>
</compile_context>

<pallas_src>
import functools

import jax
import jax.numpy as jnp
from jax import lax
from jax.experimental import pallas as pl
from jax.experimental.pallas import tpu as pltpu

LANE = 128      # lane width
TR_MAX = 4096   # rows per grid step: 4096*128*4B = 2 MiB f32 block
NCORES = 2      # leading "parallel" axis -> both TCs on v7x


def _cdiv(a, b):
    return -(-a // b)


def _afl_kernel(p_ref, t_ref, out_ref, acc_ref, *, delta, gamma, epsilon,
                neg_inv_n, nblocks, tail_rows, group_rows):
    """Accumulates sum_elems[ y_true*log(y_pred) * (a + b*(1-y_pred)^gamma) ];
    the finalize block scales by -1/num_pixels."""
    c = pl.program_id(0)
    i = pl.program_id(1)
    steps = pl.num_programs(1)
    blk = c * steps + i          # logical row-block handled this step

    @pl.when(i == 0)
    def _init():
        acc_ref[...] = jnp.zeros_like(acc_ref)

    p = p_ref[...].astype(jnp.float32)
    t = t_ref[...].astype(jnp.float32)

    # clamp(y_pred, eps, 1-eps); ce kept positive-signed (t * log p) -- the
    # global negation is folded into the finalize scale.
    p = jnp.clip(p, epsilon, 1.0 - epsilon)
    ce = t * jnp.log(p)

    one_minus_p = 1.0 - p
    if float(gamma) == 2.0:
        focal = one_minus_p * one_minus_p               # pure VPU, no pow
    elif float(gamma) == float(int(gamma)):
        focal = lax.integer_pow(one_minus_p, int(gamma))
    else:
        focal = jnp.power(one_minus_p, gamma)           # non-integer gamma only

    # Channels are lane-interleaved (even lane = background, odd = foreground).
    # Fold the channel select into two 128-lane-periodic constant rows:
    #   a = [0, delta, 0, delta, ...],  b = [1-delta, 0, 1-delta, 0, ...]
    lane = lax.broadcasted_iota(jnp.int32, (1, LANE), 1)
    odd = (lane & 1) == 1
    a = jnp.where(odd, jnp.float32(delta), jnp.float32(0.0))
    b = jnp.where(odd, jnp.float32(0.0), jnp.float32(1.0 - delta))

    loss = ce * (a + b * focal)

    def _accum(x):
        # (tr,128) -> (tr/GR, GR, 128) summed over axis 0: GR/8 independent
        # vreg accumulation chains instead of one serial (8,128) chain.
        acc_ref[...] += x.reshape(-1, group_rows, LANE).sum(axis=0)

    if tail_rows is None:
        # Row count divides the block size: every in-range block is full.
        @pl.when(blk < nblocks)
        def _():
            _accum(loss)
    else:
        @pl.when(blk < nblocks - 1)
        def _():
            _accum(loss)

        @pl.when(blk == nblocks - 1)
        def _():
            # Ragged last block: rows >= tail_rows are out-of-bounds garbage.
            # The select (not a multiply-by-zero) kills any NaN/Inf they made.
            row = lax.broadcasted_iota(jnp.int32, loss.shape, 0)
            _accum(jnp.where(row < tail_rows, loss, 0.0))

    @pl.when(i == steps - 1)
    def _finalize():
        out_ref[...] = jnp.sum(acc_ref[...], keepdims=True) * neg_inv_n


def asymmetric_focal_loss(y_pred, y_true, delta=0.25, gamma=2.0, epsilon=1e-7):
    """y_pred, y_true: (B, H, W, 2) arrays. Returns scalar f32 loss."""
    B, H, W, C = y_pred.shape
    assert C == 2, "AsymmetricFocalLoss expects 2 channels on the last axis"
    M = B * H * W                 # pixels (the mean is over these)
    N = M * 2                     # channel-interleaved element count
    rows = _cdiv(N, LANE)

    def _prep(x, target_dtype, pad_value):
        flat = x.astype(target_dtype).reshape(-1)
        if rows * LANE != N:      # at most ONE partial tail row (<128 elems)
            flat = jnp.pad(flat, (0, rows * LANE - N),
                           constant_values=pad_value)
        return flat.reshape(rows, LANE)

    # y_pred keeps its precision (bf16 stays bf16 -> half the DMA bytes).
    pred_dtype = jnp.bfloat16 if y_pred.dtype == jnp.bfloat16 else jnp.float32
    p_slab = _prep(y_pred, pred_dtype, 0.5)
    # y_true is one-hot (0/1) -> exact in bf16; halves its HBM stream.
    # TODO(synk): soft (non-0/1) labels would pick up bf16 rounding here; an
    # integer-label API would cut HBM bytes further but changes the signature.
    t_slab = _prep(y_true, jnp.bfloat16, 0.0)

    if rows <= TR_MAX:
        # Small problem: one full-array block (always a legal block shape),
        # single core, no partial-block masking.
        tr, ncores = rows, 1
    else:
        tr, ncores = TR_MAX, NCORES

    nblocks = _cdiv(rows, tr)
    steps = _cdiv(nblocks, ncores)
    rem = rows - (nblocks - 1) * tr
    tail_rows = None if rem == tr else rem
    group_rows = next((g for g in (64, 32, 16, 8) if tr % g == 0), tr)

    kernel = functools.partial(
        _afl_kernel, delta=float(delta), gamma=float(gamma),
        epsilon=float(epsilon), neg_inv_n=-1.0 / float(M),
        nblocks=nblocks, tail_rows=tail_rows, group_rows=group_rows)

    def in_index(c, i):
        # Clamp so duplicate trailing iterations (when nblocks % ncores != 0)
        # re-read the last in-bounds block; their accumulation is skipped
        # in-kernel, so no DMA ever targets rows past the array.
        return (jnp.minimum(c * steps + i, nblocks - 1), 0)

    in_spec = pl.BlockSpec((tr, LANE), in_index)

    partial_sums = pl.pallas_call(
        kernel,
        out_shape=jax.ShapeDtypeStruct((ncores, 1), jnp.float32),
        grid_spec=pltpu.PrefetchScalarGridSpec(
            num_scalar_prefetch=0,
            grid=(ncores, steps),
            in_specs=[in_spec, in_spec],
            out_specs=pl.BlockSpec((1, 1), lambda c, i: (c, 0)),
            scratch_shapes=[pltpu.VMEM((group_rows, LANE), jnp.float32)],
        ),
        compiler_params=pltpu.CompilerParams(
            dimension_semantics=("parallel", "arbitrary")),
    )(p_slab, t_slab)

    # Each entry is (-1/M) * per-core partial sum; summing gives the mean loss.
    return jnp.sum(partial_sums)


def _reference_loss(y_pred, y_true, delta=0.25, gamma=2.0, epsilon=1e-7):
    """Pure-JAX reference mirroring the PyTorch forward exactly."""
    y_pred = jnp.clip(y_pred, epsilon, 1.0 - epsilon)
    ce = -y_true * jnp.log(y_pred)
    back_ce = (1.0 - delta) * jnp.power(1.0 - y_pred[..., 0], gamma) * ce[..., 0]
    fore_ce = delta * ce[..., 1]
    return jnp.mean(back_ce + fore_ce)


if __name__ == "__main__":
    key = jax.random.PRNGKey(0)
    k1, k2 = jax.random.split(key)

    B, H, W, C = 2, 16, 16, 2  # small shapes consistent with the module's 4D path

    # y_pred: probabilities over 2 classes (softmax of random logits)
    logits = jax.random.normal(k1, (B, H, W, C), dtype=jnp.float32)
    y_pred = jax.nn.softmax(logits, axis=-1)

    # y_true: one-hot labels over 2 classes
    labels = jax.random.randint(k2, (B, H, W), 0, C)
    y_true = jax.nn.one_hot(labels, C, dtype=jnp.float32)

    loss_fn = jax.jit(lambda p, t: asymmetric_focal_loss(p, t))
    loss = jax.block_until_ready(loss_fn(y_pred, y_true))

    ref = jax.block_until_ready(_reference_loss(y_pred, y_true))
    assert jnp.allclose(loss, ref, rtol=1e-5, atol=1e-6), (loss, ref)

    print("KERNEL_OK")
</pallas_src>

<mosaic_0001>
module attributes {stable_mosaic.version = 11 : i64} {
  func.func @_afl_kernel(%arg0: i32, %arg1: i32, %arg2: memref<8x128xf32, #tpu.memory_space<vmem>>, %arg3: memref<8x128xbf16, #tpu.memory_space<vmem>>, %arg4: memref<1x1xf32, #tpu.memory_space<vmem>>, %arg5: memref<8x128xf32, #tpu.memory_space<vmem>>) attributes {dimension_semantics = [#tpu.dimension_semantics<parallel>, #tpu.dimension_semantics<arbitrary>], iteration_bounds = array<i64: 1, 1>, scalar_prefetch = 0 : i64, scratch_operands = 1 : i64, tpu.core_type = #tpu.core_type<tc>, window_params = [{transform_indices = @transform_0, window_bounds = array<i64: 8, 128>}, {transform_indices = @transform_1, window_bounds = array<i64: 8, 128>}, {transform_indices = @transform_2, window_bounds = array<i64: 1, 1>}]} {
    %c1_i32 = arith.constant 1 : i32
    %0 = arith.muli %arg0, %c1_i32 : i32
    %1 = arith.addi %0, %arg1 : i32
    %c0_i32 = arith.constant 0 : i32
    %2 = arith.cmpi eq, %arg1, %c0_i32 : i32
    %3 = arith.extui %2 : i1 to i32
    %c0_i32_0 = arith.constant 0 : i32
    %4 = arith.cmpi ne, %3, %c0_i32_0 : i32
    scf.if %4 {
      %cst_16 = arith.constant 0.000000e+00 : f32
      %39 = vector.broadcast %cst_16 : f32 to vector<8x128xf32>
      %c0_17 = arith.constant 0 : index
      %c0_18 = arith.constant 0 : index
      %40 = vector.load %arg5[%c0_17, %c0_18] : memref<8x128xf32, #tpu.memory_space<vmem>>, vector<8x128xf32>
      tpu.vector_store %arg5[%c0_17, %c0_18], %39 {strides = array<i32>} : memref<8x128xf32, #tpu.memory_space<vmem>>, vector<8x128xf32>,
    } else {
    }
    %c0 = arith.constant 0 : index
    %c0_1 = arith.constant 0 : index
    %5 = vector.load %arg2[%c0, %c0_1] : memref<8x128xf32, #tpu.memory_space<vmem>>, vector<8x128xf32>
    %c0_2 = arith.constant 0 : index
    %c0_3 = arith.constant 0 : index
    %6 = vector.load %arg3[%c0_2, %c0_3] : memref<8x128xbf16, #tpu.memory_space<vmem>>, vector<8x128xbf16>
    %7 = arith.extf %6 : vector<8x128xbf16> to vector<8x128xf32>
    %cst = arith.constant 1.000000e-07 : f32
    %cst_4 = arith.constant 0.99999988 : f32
    %8 = vector.broadcast %cst : f32 to vector<8x128xf32>
    %9 = arith.maximumf %8, %5 : vector<8x128xf32>
    %10 = vector.broadcast %cst_4 : f32 to vector<8x128xf32>
    %11 = arith.minimumf %10, %9 : vector<8x128xf32>
    %12 = math.log %11 : vector<8x128xf32>
    %13 = arith.mulf %7, %12 : vector<8x128xf32>
    %cst_5 = arith.constant 1.000000e+00 : f32
    %14 = vector.broadcast %cst_5 : f32 to vector<8x128xf32>
    %15 = arith.subf %14, %11 : vector<8x128xf32>
    %16 = arith.mulf %15, %15 : vector<8x128xf32>
    %17 = tpu.iota {dimensions = array<i32: 1>} : vector<1x128xi32>
    %c1_i32_6 = arith.constant 1 : i32
    %18 = vector.broadcast %c1_i32_6 : i32 to vector<1x128xi32>
    %19 = arith.andi %17, %18 : vector<1x128xi32>
    %c1_i32_7 = arith.constant 1 : i32
    %20 = vector.broadcast %c1_i32_7 : i32 to vector<1x128xi32>
    %21 = arith.cmpi eq, %19, %20 : vector<1x128xi32>
    %cst_8 = arith.constant 2.500000e-01 : f32
    %cst_9 = arith.constant 0.000000e+00 : f32
    %22 = vector.broadcast %cst_8 : f32 to vector<1x128xf32>
    %23 = vector.broadcast %cst_9 : f32 to vector<1x128xf32>
    %24 = arith.select %21, %22, %23 : vector<1x128xi1>, vector<1x128xf32>
    %cst_10 = arith.constant 0.000000e+00 : f32
    %cst_11 = arith.constant 7.500000e-01 : f32
    %25 = vector.broadcast %cst_10 : f32 to vector<1x128xf32>
    %26 = vector.broadcast %cst_11 : f32 to vector<1x128xf32>
    %27 = arith.select %21, %25, %26 : vector<1x128xi1>, vector<1x128xf32>
    %28 = vector.broadcast %27 : vector<1x128xf32> to vector<8x128xf32>
    %29 = arith.mulf %28, %16 : vector<8x128xf32>
    %30 = vector.broadcast %24 : vector<1x128xf32> to vector<8x128xf32>
    %31 = arith.addf %30, %29 : vector<8x128xf32>
    %32 = arith.mulf %13, %31 : vector<8x128xf32>
    %c1_i32_12 = arith.constant 1 : i32
    %33 = arith.cmpi slt, %1, %c1_i32_12 : i32
    %34 = arith.extui %33 : i1 to i32
    %c0_i32_13 = arith.constant 0 : i32
    %35 = arith.cmpi ne, %34, %c0_i32_13 : i32
    scf.if %35 {
      %c0_16 = arith.constant 0 : index
      %c0_17 = arith.constant 0 : index
      %39 = vector.load %arg5[%c0_16, %c0_17] : memref<8x128xf32, #tpu.memory_space<vmem>>, vector<8x128xf32>
      %40 = vector.shape_cast %32 : vector<8x128xf32> to vector<1x8x128xf32>
      %cst_18 = arith.constant dense<0.000000e+00> : vector<8x128xf32>
      %41 = vector.multi_reduction <add>, %40, %cst_18 [0] : vector<1x8x128xf32> to vector<8x128xf32>
      %42 = arith.addf %39, %41 : vector<8x128xf32>
      %c0_19 = arith.constant 0 : index
      %c0_20 = arith.constant 0 : index
      %43 = vector.load %arg5[%c0_19, %c0_20] : memref<8x128xf32, #tpu.memory_space<vmem>>, vector<8x128xf32>
      tpu.vector_store %arg5[%c0_19, %c0_20], %42 {strides = array<i32>} : memref<8x128xf32, #tpu.memory_space<vmem>>, vector<8x128xf32>,
    } else {
    }
    %c0_i32_14 = arith.constant 0 : i32
    %36 = arith.cmpi eq, %arg1, %c0_i32_14 : i32
    %37 = arith.extui %36 : i1 to i32
    %c0_i32_15 = arith.constant 0 : i32
    %38 = arith.cmpi ne, %37, %c0_i32_15 : i32
    scf.if %38 {
      %c0_16 = arith.constant 0 : index
      %c0_17 = arith.constant 0 : index
      %39 = vector.load %arg5[%c0_16, %c0_17] : memref<8x128xf32, #tpu.memory_space<vmem>>, vector<8x128xf32>
      %40 = vector.shape_cast %39 : vector<8x128xf32> to vector<1x8x128xf32>
      %cst_18 = arith.constant dense<0.000000e+00> : vector<1xf32>
      %41 = vector.multi_reduction <add>, %40, %cst_18 [1, 2] : vector<1x8x128xf32> to vector<1xf32>
      %42 = vector.shape_cast %41 : vector<1xf32> to vector<1x1x1xf32>
      %43 = vector.extract %42[0, 0, 0] : f32 from vector<1x1x1xf32>
      %44 = vector.broadcast %43 : f32 to vector<1x1xf32>
      %cst_19 = arith.constant -0.001953125 : f32
      %45 = vector.broadcast %cst_19 : f32 to vector<1x1xf32>
      %46 = arith.mulf %44, %45 : vector<1x1xf32>
      %c0_20 = arith.constant 0 : index
      %c0_21 = arith.constant 0 : index
      %47 = vector.load %arg4[%c0_20, %c0_21] : memref<1x1xf32, #tpu.memory_space<vmem>>, vector<1x1xf32>
      tpu.vector_store %arg4[%c0_20, %c0_21], %46 {strides = array<i32>} : memref<1x1xf32, #tpu.memory_space<vmem>>, vector<1x1xf32>,
    } else {
    }
    return
  }
  func.func @transform_0(%arg0: i32, %arg1: i32) -> (i32, i32) {
    %c1_i32 = arith.constant 1 : i32
    %0 = arith.muli %arg0, %c1_i32 : i32
    %1 = arith.addi %0, %arg1 : i32
    %c0_i32 = arith.constant 0 : i32
    %2 = arith.minsi %1, %c0_i32 : i32
    %c0_i32_0 = arith.constant 0 : i32
    %c0_i32_1 = arith.constant 0 : i32
    return %2, %c0_i32_0 : i32, i32
  }
  func.func @transform_1(%arg0: i32, %arg1: i32) -> (i32, i32) {
    %c1_i32 = arith.constant 1 : i32
    %0 = arith.muli %arg0, %c1_i32 : i32
    %1 = arith.addi %0, %arg1 : i32
    %c0_i32 = arith.constant 0 : i32
    %2 = arith.minsi %1, %c0_i32 : i32
    %c0_i32_0 = arith.constant 0 : i32
    %c0_i32_1 = arith.constant 0 : i32
    return %2, %c0_i32_0 : i32, i32
  }
  func.func @transform_2(%arg0: i32, %arg1: i32) -> (i32, i32) {
    %c0_i32 = arith.constant 0 : i32
    %c0_i32_0 = arith.constant 0 : i32
    return %arg0, %c0_i32 : i32, i32
  }
}

</mosaic_0001>

<llo_original>
// kernel: _lambda_.1
$region0: #{_lambda_.1}
  #allocation0 [shape = 'u32[]', space=smem, size = 0x4, offset = 0x4, fixed_abs, tag = 'smem constant byte address 0x4 - core index']
  #allocation1 [shape = 'u32[144,128]{1,0:T(1,128)}', space=vmem, size = 0x12000, scoped, tag = 'internal scratch']
  #allocation2 [shape = 'f32[8,128]{1,0:T(8,128)}', space=vmem, size = 0x1000, scoped, tag = 'scratch operand']
  %s0 = inlined_call_operand.vmem [shape: f32[8,128], index: 0, kind: input, shape index: {}]
  %s1 = inlined_call_operand.vmem [shape: bf16[8,128], index: 1, kind: input, shape index: {}]
  %s2 = inlined_call_operand.hbm [shape: f32[1,1], index: 2, kind: output, shape index: {}]
  %s3 = sld [smem:[#allocation0]]
  $region30: #{_lambda_.1} parent=0
    _
  %s5 = ssub.s32 1, %s3
  %s6 = scalar_select 0, %s5, %s3
  $region1: #{_lambda_.1} parent=0
    #allocation3 [shape = 'u8[512]{0}', space=vmem, size = 0x400, scoped, tag = 'output window, operand 0, single buffered']
    #allocation4 [shape = 's32[1]{0}', space=sflag, size = 0x4, scoped, tag = 'scoped memory for _lambda_.1']
    %7 = vsyncpa [#allocation4], 0
    // Predicated region
    $region2: #{_lambda_.1} parent=1 // pred_check
      _
    $region3: #{_lambda_.1} parent=1 // pred_check_branch
      %9 = sbr.rel (0) target = $region5
    $region4: #{_lambda_.1} parent=1 // pred_region
      %s10 = sadd.s32 0, 0
      %p11 = scmp.lt.s32.totalorder %s10, 0
      %s12 = scalar_select %p11, %s10, 0
      %p13 = scmp.lt.s32.totalorder %s12, 0
      %s14 = scalar_select %p13, %s12, 0
      %s15 = smul.addr %s14, 8
      %s16 = scalar_lea.vmem %s0, %s15
      %s17 = sadd.s32 0, 0
      %p18 = scmp.lt.s32.totalorder %s17, 0
      %s19 = scalar_select %p18, %s17, 0
    $region5: #{_lambda_.1} parent=1 // pred_fallthru
      _
    // Predicated region
    $region6: #{_lambda_.1} parent=1 // pred_check
      _
    $region7: #{_lambda_.1} parent=1 // pred_check_branch
      %21 = sbr.rel (0) target = $region9
    $region8: #{_lambda_.1} parent=1 // pred_region
      %s22 = sadd.s32 0, 0
      %p23 = scmp.lt.s32.totalorder %s22, 0
      %s24 = scalar_select %p23, %s22, 0
      %p25 = scmp.lt.s32.totalorder %s24, 0
      %s26 = scalar_select %p25, %s24, 0
      %s27 = smul.addr %s26, 4
      %s28 = scalar_lea.vmem %s1, %s27
      %s29 = sadd.s32 0, 0
      %p30 = scmp.lt.s32.totalorder %s29, 0
      %s31 = scalar_select %p30, %s29, 0
    $region9: #{_lambda_.1} parent=1 // pred_fallthru
      _
    %s32 = sadd.s32 0, 0
    %p33 = scmp.lt.s32.totalorder %s32, 0
    %s34 = scalar_select %p33, %s32, 0
    %p35 = scmp.lt.s32.totalorder %s34, 0
    %s36 = scalar_select %p35, %s34, 0
    %s37 = smul.addr %s36, 8
    %s38 = scalar_lea.vmem %s0, %s37
    %s39 = sadd.s32 0, 0
    %p40 = scmp.lt.s32.totalorder %s39, 0
    %s41 = scalar_select %p40, %s39, 0
    %p42 = scmp.lt.s32.totalorder %s41, 0
    %s43 = scalar_select %p42, %s41, 0
    %s44 = smul.addr %s43, 4
    %s45 = scalar_lea.vmem %s1, %s44
    %s46 = sadd.s32 0, 0
    %p47 = scmp.lt.s32.totalorder %s46, 0
    %s48 = scalar_select %p47, %s46, 0
    %p49 = scmp.lt.s32.totalorder %s48, 0
    %s50 = scalar_select %p49, %s48, 0
    %s51 = smul.addr %s50, 8
    %s52 = scalar_lea.vmem %s0, %s51
    %s53 = sadd.s32 0, 0
    %p54 = scmp.lt.s32.totalorder %s53, 0
    %s55 = scalar_select %p54, %s53, 0
    %s56 = sadd.s32 0, 0
    %p57 = scmp.lt.s32.totalorder %s56, 0
    %s58 = scalar_select %p57, %s56, 0
    %p59 = scmp.lt.s32.totalorder %s58, 0
    %s60 = scalar_select %p59, %s58, 0
    %s61 = smul.addr %s60, 4
    %s62 = scalar_lea.vmem %s1, %s61
    %s63 = sadd.s32 0, 0
    %p64 = scmp.lt.s32.totalorder %s63, 0
    %s65 = scalar_select %p64, %s63, 0
    %s66 = sadd.s32 0, 0
    %p67 = scmp.eq.s32.totalorder 0, 0
    // Predicated region
    $region10: #{_lambda_.1} parent=1 // pred_check
      %p68 = pneg %p67
    $region11: #{_lambda_.1} parent=1 // pred_check_branch
      %70 = sbr.rel (%p68) target = $region13
    $region12: #{_lambda_.1} parent=1 // pred_region
      %71 = vst [vmem:[#allocation2] sm:$0xff] 0.0
    $region13: #{_lambda_.1} parent=1 // pred_fallthru
      _
    %v72 = vld [vmem:[%s52] sm:$0xff]
    %v73 = vld [vmem:[%s62] sm:$0xf]
    %v74 = vunpack.c.l.bf16 %v73
    %v75 = vmax.f32 %v72, 1e-07
    %v76 = vmin.f32 %v75, 0.9999999
    %v77 = vlog2.pop %v76
    %v78 = vmul.f32 %v77, 0.6931472
    %v79 = vmul.f32 %v74, %v78
    %v80 = vsub.f32 1.0, %v76
    %v81 = vmul.f32 %v80, %v80
    %v82 = vlaneseq
    %v83 = vand.u32 %v82, 127
    %v84 = vand.u32 %v83, 1
    %vm85 = vcmp.eq.s32.totalorder %v84, 1
    %v86 = vsel %vm85, 0.25, 0.0
    %v87 = vsel %vm85, 0.0, 0.75
    %v88 = vmul.f32 %v87, %v81
    %v89 = vadd.f32 %v86, %v88
    %v90 = vmul.f32 %v79, %v89
    %p91 = scmp.lt.s32.totalorder %s66, 1
    // Predicated region
    $region14: #{_lambda_.1} parent=1 // pred_check
      %p92 = pneg %p91
    $region15: #{_lambda_.1} parent=1 // pred_check_branch
      %94 = sbr.rel (%p92) target = $region17
    $region16: #{_lambda_.1} parent=1 // pred_region
      %v95 = vld [vmem:[#allocation2] sm:$0xff]
      %v96 = vadd.f32 %v90, 0.0
      %v97 = vadd.f32 %v95, %v96
      %98 = vst [vmem:[#allocation2] sm:$0xff] %v97
    $region17: #{_lambda_.1} parent=1 // pred_fallthru
      _
    // Predicated region
    $region18: #{_lambda_.1} parent=1 // pred_check
      %p99 = pneg %p67
    $region19: #{_lambda_.1} parent=1 // pred_check_branch
      %101 = sbr.rel (%p99) target = $region21
    $region20: #{_lambda_.1} parent=1 // pred_region
      %v102 = vld [vmem:[#allocation2] sm:$0xff]
      %103 = vadd.xlane.f32.xlu0 %v102
      %v104 = vpop.xlane.xlu0 %103
      %v105 = vrot.slane %v104, 4
      %v106 = vadd.f32 %v104, %v105
      %v107 = vrot.slane %v106, 2
      %v108 = vadd.f32 %v106, %v107
      %v109 = vrot.slane %v108, 1
      %v110 = vadd.f32 %v108, %v109
      %s111 = vtos %v110
      %v112 = vstv %s111
      %v113 = vmul.f32 %v112, -0.001953125
      %vm114 = vcmask 0
      %115 = vst.msk [vmem:[#allocation3] sm:$0x1] %vm114, %v113
    $region21: #{_lambda_.1} parent=1 // pred_fallthru
      _
    // Predicated region
    $region22: #{_lambda_.1} parent=1 // pred_check
      _
    $region23: #{_lambda_.1} parent=1 // pred_check_branch
      %117 = sbr.rel (0) target = $region25
    $region24: #{_lambda_.1} parent=1 // pred_region
      %s119 = ssub.s32 16, 16
      %120 = vsyncadd [#allocation4], %s119
      %s122 = sshll.u32 [#allocation3], 4
      %s123 = int_to_ptr.vmem [resolvable:$true] %s122
      %125 = dma.vmem_to_hbm [thread:$0]  %s123, 16, %s2, [#allocation4]
    $region25: #{_lambda_.1} parent=1 // pred_fallthru
      _
    // Predicated region
    $region26: #{_lambda_.1} parent=1 // pred_check
      _
    $region27: #{_lambda_.1} parent=1 // pred_check_branch
      %127 = sbr.rel (0) target = $region29
    $region28: #{_lambda_.1} parent=1 // pred_region
      %128 = dma.done [#allocation4], 16
    $region29: #{_lambda_.1} parent=1 // pred_fallthru
      _
    %129 = vsyncpa [#allocation4], 1

</llo_original>
